<compile_context>
chip_gen: v6e
topology: v6e:2x2x1
jax: 0.10.0
libtpu: 0.0.40
codegen_flags: <defaults>
</compile_context>

<pallas_src>
import jax
import jax.numpy as jnp
from jax.experimental import pallas as pl
from jax.experimental.pallas import tpu as pltpu


def concat_dma_kernel(x1, x2, x3, x4, x5, x6, o_ref, sems):
    """Output channel layout: [x1 | x2 | x3 | x4 | x5 | x6 | x1[:, 0:2]].

    Grid step 0 issues the copies for x1..x3 plus the duplicated 2 channels
    of x1; grid step 1 issues x4..x6.  All refs live in HBM (pl.ANY), so the
    kernel is pure data movement bounded only by HBM bandwidth — it never
    touches VMEM and its footprint is independent of problem size.
    """
    refs = (x1, x2, x3, x4, x5, x6)
    offs = [0]
    for r in refs:
        offs.append(offs[-1] + r.shape[1])
    c_total = offs[-1]

    def issue(indices, include_dup):
        copies = []
        for i in indices:
            cp = pltpu.make_async_copy(
                refs[i], o_ref.at[:, offs[i]:offs[i + 1]], sems.at[i])
            cp.start()
            copies.append(cp)
        if include_dup:
            # v4's tail == x1[:, 0:2]; second HBM->HBM copy straight from x1.
            cp = pltpu.make_async_copy(
                x1.at[:, 0:2], o_ref.at[:, c_total:c_total + 2], sems.at[6])
            cp.start()
            copies.append(cp)
        # All copies were started first so they overlap on the DMA engine.
        for cp in copies:
            cp.wait()

    @pl.when(pl.program_id(0) == 0)
    def _():
        issue((0, 1, 2), True)

    @pl.when(pl.program_id(0) == 1)
    def _():
        issue((3, 4, 5), False)


def model_forward(x1, x2, x3, x4, x5, x6):
    xs = (x1, x2, x3, x4, x5, x6)
    n, _, h, w = x1.shape
    c_total = sum(x.shape[1] for x in xs)
    c_out = c_total + 2

    any_spec = pl.BlockSpec(memory_space=pl.ANY)  # raw HBM refs, manual DMA
    return pl.pallas_call(
        concat_dma_kernel,
        out_shape=jax.ShapeDtypeStruct((n, c_out, h, w), x1.dtype),
        grid=(2,),
        in_specs=[any_spec] * 6,
        out_specs=any_spec,
        scratch_shapes=[pltpu.SemaphoreType.DMA((7,))],
        compiler_params=pltpu.CompilerParams(
            dimension_semantics=("parallel",)),
    )(*xs)


if __name__ == "__main__":
    key = jax.random.PRNGKey(0)
    k1, k2, k3, k4, k5, k6 = jax.random.split(key, 6)
    # torch.cat requires matching spatial dims, so all inputs share (H, W).
    # Channel counts mirror the original module; spatial dims kept small.
    N, H, W = 1, 16, 128
    x1 = jax.random.normal(k1, (N, 16, H, W), dtype=jnp.float32)
    x2 = jax.random.normal(k2, (N, 24, H, W), dtype=jnp.float32)
    x3 = jax.random.normal(k3, (N, 32, H, W), dtype=jnp.float32)
    x4 = jax.random.normal(k4, (N, 64, H, W), dtype=jnp.float32)
    x5 = jax.random.normal(k5, (N, 96, H, W), dtype=jnp.float32)
    x6 = jax.random.normal(k6, (N, 160, H, W), dtype=jnp.float32)

    out = model_forward(x1, x2, x3, x4, x5, x6)
    jax.block_until_ready(out)

    # Reference check against plain JAX.
    v1 = jnp.concatenate([x1, x2, x3, x4, x5, x6], axis=1)
    ref = jnp.concatenate([v1, v1[:, 0:2]], axis=1)
    assert out.shape == ref.shape, (out.shape, ref.shape)
    assert jnp.allclose(out, ref), "mismatch vs reference"
    print("KERNEL_OK")
</pallas_src>

<mosaic_0001>
module attributes {stable_mosaic.version = 11 : i64} {
  func.func @concat_dma_kernel(%arg0: i32, %arg1: memref<1x16x16x128xf32, #tpu.memory_space<any>>, %arg2: memref<1x24x16x128xf32, #tpu.memory_space<any>>, %arg3: memref<1x32x16x128xf32, #tpu.memory_space<any>>, %arg4: memref<1x64x16x128xf32, #tpu.memory_space<any>>, %arg5: memref<1x96x16x128xf32, #tpu.memory_space<any>>, %arg6: memref<1x160x16x128xf32, #tpu.memory_space<any>>, %arg7: memref<1x394x16x128xf32, #tpu.memory_space<any>>, %arg8: memref<7x!tpu.dma_semaphore, #tpu.memory_space<semaphore_mem>>) attributes {dimension_semantics = [#tpu.dimension_semantics<parallel>], iteration_bounds = array<i64: 2>, scalar_prefetch = 0 : i64, scratch_operands = 1 : i64, tpu.core_type = #tpu.core_type<tc>, window_params = [{}, {}, {}, {}, {}, {}, {}]} {
    %c0_i32 = arith.constant 0 : i32
    %0 = arith.cmpi eq, %arg0, %c0_i32 : i32
    %1 = arith.extui %0 : i1 to i32
    %c0_i32_0 = arith.constant 0 : i32
    %2 = arith.cmpi ne, %1, %c0_i32_0 : i32
    scf.if %2 {
      %c0_i32_2 = arith.constant 0 : i32
      %c0_i32_3 = arith.constant 0 : i32
      %c0_i32_4 = arith.constant 0 : i32
      %c0_i32_5 = arith.constant 0 : i32
      %c0_i32_6 = arith.constant 0 : i32
      %6 = tpu.memref_slice %arg7[%c0_i32_3, %c0_i32_4, %c0_i32_5, %c0_i32_6] : memref<1x394x16x128xf32, #tpu.memory_space<any>> -> memref<1x16x16x128xf32, #tpu.memory_space<any>>
      %7 = tpu.memref_slice %arg8[%c0_i32_2] : memref<7x!tpu.dma_semaphore, #tpu.memory_space<semaphore_mem>> -> memref<1x!tpu.dma_semaphore, #tpu.memory_space<semaphore_mem>>
      %8 = tpu.memref_squeeze %7 : memref<1x!tpu.dma_semaphore, #tpu.memory_space<semaphore_mem>> -> memref<!tpu.dma_semaphore, #tpu.memory_space<semaphore_mem>>
      tpu.enqueue_dma source(%arg1 : memref<1x16x16x128xf32, #tpu.memory_space<any>>) target(%6 : memref<1x16x16x128xf32, #tpu.memory_space<any>>) target_semaphore(%8 : memref<!tpu.dma_semaphore, #tpu.memory_space<semaphore_mem>>)
      %c1_i32_7 = arith.constant 1 : i32
      %c0_i32_8 = arith.constant 0 : i32
      %c16_i32 = arith.constant 16 : i32
      %c0_i32_9 = arith.constant 0 : i32
      %c0_i32_10 = arith.constant 0 : i32
      %9 = tpu.memref_slice %arg7[%c0_i32_8, %c16_i32, %c0_i32_9, %c0_i32_10] : memref<1x394x16x128xf32, #tpu.memory_space<any>> -> memref<1x24x16x128xf32, #tpu.memory_space<any>>
      %10 = tpu.memref_slice %arg8[%c1_i32_7] : memref<7x!tpu.dma_semaphore, #tpu.memory_space<semaphore_mem>> -> memref<1x!tpu.dma_semaphore, #tpu.memory_space<semaphore_mem>>
      %11 = tpu.memref_squeeze %10 : memref<1x!tpu.dma_semaphore, #tpu.memory_space<semaphore_mem>> -> memref<!tpu.dma_semaphore, #tpu.memory_space<semaphore_mem>>
      tpu.enqueue_dma source(%arg2 : memref<1x24x16x128xf32, #tpu.memory_space<any>>) target(%9 : memref<1x24x16x128xf32, #tpu.memory_space<any>>) target_semaphore(%11 : memref<!tpu.dma_semaphore, #tpu.memory_space<semaphore_mem>>)
      %c2_i32 = arith.constant 2 : i32
      %c0_i32_11 = arith.constant 0 : i32
      %c40_i32 = arith.constant 40 : i32
      %c0_i32_12 = arith.constant 0 : i32
      %c0_i32_13 = arith.constant 0 : i32
      %12 = tpu.memref_slice %arg7[%c0_i32_11, %c40_i32, %c0_i32_12, %c0_i32_13] : memref<1x394x16x128xf32, #tpu.memory_space<any>> -> memref<1x32x16x128xf32, #tpu.memory_space<any>>
      %13 = tpu.memref_slice %arg8[%c2_i32] : memref<7x!tpu.dma_semaphore, #tpu.memory_space<semaphore_mem>> -> memref<1x!tpu.dma_semaphore, #tpu.memory_space<semaphore_mem>>
      %14 = tpu.memref_squeeze %13 : memref<1x!tpu.dma_semaphore, #tpu.memory_space<semaphore_mem>> -> memref<!tpu.dma_semaphore, #tpu.memory_space<semaphore_mem>>
      tpu.enqueue_dma source(%arg3 : memref<1x32x16x128xf32, #tpu.memory_space<any>>) target(%12 : memref<1x32x16x128xf32, #tpu.memory_space<any>>) target_semaphore(%14 : memref<!tpu.dma_semaphore, #tpu.memory_space<semaphore_mem>>)
      %c6_i32 = arith.constant 6 : i32
      %c0_i32_14 = arith.constant 0 : i32
      %c0_i32_15 = arith.constant 0 : i32
      %c0_i32_16 = arith.constant 0 : i32
      %c0_i32_17 = arith.constant 0 : i32
      %15 = tpu.memref_slice %arg1[%c0_i32_14, %c0_i32_15, %c0_i32_16, %c0_i32_17] : memref<1x16x16x128xf32, #tpu.memory_space<any>> -> memref<1x2x16x128xf32, #tpu.memory_space<any>>
      %c0_i32_18 = arith.constant 0 : i32
      %c392_i32 = arith.constant 392 : i32
      %c0_i32_19 = arith.constant 0 : i32
      %c0_i32_20 = arith.constant 0 : i32
      %16 = tpu.memref_slice %arg7[%c0_i32_18, %c392_i32, %c0_i32_19, %c0_i32_20] : memref<1x394x16x128xf32, #tpu.memory_space<any>> -> memref<1x2x16x128xf32, #tpu.memory_space<any>>
      %17 = tpu.memref_slice %arg8[%c6_i32] : memref<7x!tpu.dma_semaphore, #tpu.memory_space<semaphore_mem>> -> memref<1x!tpu.dma_semaphore, #tpu.memory_space<semaphore_mem>>
      %18 = tpu.memref_squeeze %17 : memref<1x!tpu.dma_semaphore, #tpu.memory_space<semaphore_mem>> -> memref<!tpu.dma_semaphore, #tpu.memory_space<semaphore_mem>>
      tpu.enqueue_dma source(%15 : memref<1x2x16x128xf32, #tpu.memory_space<any>>) target(%16 : memref<1x2x16x128xf32, #tpu.memory_space<any>>) target_semaphore(%18 : memref<!tpu.dma_semaphore, #tpu.memory_space<semaphore_mem>>)
      %c0_i32_21 = arith.constant 0 : i32
      %c0_i32_22 = arith.constant 0 : i32
      %c0_i32_23 = arith.constant 0 : i32
      %c0_i32_24 = arith.constant 0 : i32
      %c0_i32_25 = arith.constant 0 : i32
      %19 = tpu.memref_slice %arg7[%c0_i32_22, %c0_i32_23, %c0_i32_24, %c0_i32_25] : memref<1x394x16x128xf32, #tpu.memory_space<any>> -> memref<1x16x16x128xf32, #tpu.memory_space<any>>
      %20 = tpu.memref_slice %arg8[%c0_i32_21] : memref<7x!tpu.dma_semaphore, #tpu.memory_space<semaphore_mem>> -> memref<1x!tpu.dma_semaphore, #tpu.memory_space<semaphore_mem>>
      %21 = tpu.memref_squeeze %20 : memref<1x!tpu.dma_semaphore, #tpu.memory_space<semaphore_mem>> -> memref<!tpu.dma_semaphore, #tpu.memory_space<semaphore_mem>>
      tpu.wait_dma2 semaphore(%21 : memref<!tpu.dma_semaphore, #tpu.memory_space<semaphore_mem>>) src(%arg1 : memref<1x16x16x128xf32, #tpu.memory_space<any>>) dst(%19 : memref<1x16x16x128xf32, #tpu.memory_space<any>>)
      %c1_i32_26 = arith.constant 1 : i32
      %c0_i32_27 = arith.constant 0 : i32
      %c16_i32_28 = arith.constant 16 : i32
      %c0_i32_29 = arith.constant 0 : i32
      %c0_i32_30 = arith.constant 0 : i32
      %22 = tpu.memref_slice %arg7[%c0_i32_27, %c16_i32_28, %c0_i32_29, %c0_i32_30] : memref<1x394x16x128xf32, #tpu.memory_space<any>> -> memref<1x24x16x128xf32, #tpu.memory_space<any>>
      %23 = tpu.memref_slice %arg8[%c1_i32_26] : memref<7x!tpu.dma_semaphore, #tpu.memory_space<semaphore_mem>> -> memref<1x!tpu.dma_semaphore, #tpu.memory_space<semaphore_mem>>
      %24 = tpu.memref_squeeze %23 : memref<1x!tpu.dma_semaphore, #tpu.memory_space<semaphore_mem>> -> memref<!tpu.dma_semaphore, #tpu.memory_space<semaphore_mem>>
      tpu.wait_dma2 semaphore(%24 : memref<!tpu.dma_semaphore, #tpu.memory_space<semaphore_mem>>) src(%arg2 : memref<1x24x16x128xf32, #tpu.memory_space<any>>) dst(%22 : memref<1x24x16x128xf32, #tpu.memory_space<any>>)
      %c2_i32_31 = arith.constant 2 : i32
      %c0_i32_32 = arith.constant 0 : i32
      %c40_i32_33 = arith.constant 40 : i32
      %c0_i32_34 = arith.constant 0 : i32
      %c0_i32_35 = arith.constant 0 : i32
      %25 = tpu.memref_slice %arg7[%c0_i32_32, %c40_i32_33, %c0_i32_34, %c0_i32_35] : memref<1x394x16x128xf32, #tpu.memory_space<any>> -> memref<1x32x16x128xf32, #tpu.memory_space<any>>
      %26 = tpu.memref_slice %arg8[%c2_i32_31] : memref<7x!tpu.dma_semaphore, #tpu.memory_space<semaphore_mem>> -> memref<1x!tpu.dma_semaphore, #tpu.memory_space<semaphore_mem>>
      %27 = tpu.memref_squeeze %26 : memref<1x!tpu.dma_semaphore, #tpu.memory_space<semaphore_mem>> -> memref<!tpu.dma_semaphore, #tpu.memory_space<semaphore_mem>>
      tpu.wait_dma2 semaphore(%27 : memref<!tpu.dma_semaphore, #tpu.memory_space<semaphore_mem>>) src(%arg3 : memref<1x32x16x128xf32, #tpu.memory_space<any>>) dst(%25 : memref<1x32x16x128xf32, #tpu.memory_space<any>>)
      %c6_i32_36 = arith.constant 6 : i32
      %c0_i32_37 = arith.constant 0 : i32
      %c0_i32_38 = arith.constant 0 : i32
      %c0_i32_39 = arith.constant 0 : i32
      %c0_i32_40 = arith.constant 0 : i32
      %28 = tpu.memref_slice %arg1[%c0_i32_37, %c0_i32_38, %c0_i32_39, %c0_i32_40] : memref<1x16x16x128xf32, #tpu.memory_space<any>> -> memref<1x2x16x128xf32, #tpu.memory_space<any>>
      %c0_i32_41 = arith.constant 0 : i32
      %c392_i32_42 = arith.constant 392 : i32
      %c0_i32_43 = arith.constant 0 : i32
      %c0_i32_44 = arith.constant 0 : i32
      %29 = tpu.memref_slice %arg7[%c0_i32_41, %c392_i32_42, %c0_i32_43, %c0_i32_44] : memref<1x394x16x128xf32, #tpu.memory_space<any>> -> memref<1x2x16x128xf32, #tpu.memory_space<any>>
      %30 = tpu.memref_slice %arg8[%c6_i32_36] : memref<7x!tpu.dma_semaphore, #tpu.memory_space<semaphore_mem>> -> memref<1x!tpu.dma_semaphore, #tpu.memory_space<semaphore_mem>>
      %31 = tpu.memref_squeeze %30 : memref<1x!tpu.dma_semaphore, #tpu.memory_space<semaphore_mem>> -> memref<!tpu.dma_semaphore, #tpu.memory_space<semaphore_mem>>
      tpu.wait_dma2 semaphore(%31 : memref<!tpu.dma_semaphore, #tpu.memory_space<semaphore_mem>>) src(%28 : memref<1x2x16x128xf32, #tpu.memory_space<any>>) dst(%29 : memref<1x2x16x128xf32, #tpu.memory_space<any>>)
    } else {
    }
    %c1_i32 = arith.constant 1 : i32
    %3 = arith.cmpi eq, %arg0, %c1_i32 : i32
    %4 = arith.extui %3 : i1 to i32
    %c0_i32_1 = arith.constant 0 : i32
    %5 = arith.cmpi ne, %4, %c0_i32_1 : i32
    scf.if %5 {
      %c3_i32 = arith.constant 3 : i32
      %c0_i32_2 = arith.constant 0 : i32
      %c72_i32 = arith.constant 72 : i32
      %c0_i32_3 = arith.constant 0 : i32
      %c0_i32_4 = arith.constant 0 : i32
      %6 = tpu.memref_slice %arg7[%c0_i32_2, %c72_i32, %c0_i32_3, %c0_i32_4] : memref<1x394x16x128xf32, #tpu.memory_space<any>> -> memref<1x64x16x128xf32, #tpu.memory_space<any>>
      %7 = tpu.memref_slice %arg8[%c3_i32] : memref<7x!tpu.dma_semaphore, #tpu.memory_space<semaphore_mem>> -> memref<1x!tpu.dma_semaphore, #tpu.memory_space<semaphore_mem>>
      %8 = tpu.memref_squeeze %7 : memref<1x!tpu.dma_semaphore, #tpu.memory_space<semaphore_mem>> -> memref<!tpu.dma_semaphore, #tpu.memory_space<semaphore_mem>>
      tpu.enqueue_dma source(%arg4 : memref<1x64x16x128xf32, #tpu.memory_space<any>>) target(%6 : memref<1x64x16x128xf32, #tpu.memory_space<any>>) target_semaphore(%8 : memref<!tpu.dma_semaphore, #tpu.memory_space<semaphore_mem>>)
      %c4_i32 = arith.constant 4 : i32
      %c0_i32_5 = arith.constant 0 : i32
      %c136_i32 = arith.constant 136 : i32
      %c0_i32_6 = arith.constant 0 : i32
      %c0_i32_7 = arith.constant 0 : i32
      %9 = tpu.memref_slice %arg7[%c0_i32_5, %c136_i32, %c0_i32_6, %c0_i32_7] : memref<1x394x16x128xf32, #tpu.memory_space<any>> -> memref<1x96x16x128xf32, #tpu.memory_space<any>>
      %10 = tpu.memref_slice %arg8[%c4_i32] : memref<7x!tpu.dma_semaphore, #tpu.memory_space<semaphore_mem>> -> memref<1x!tpu.dma_semaphore, #tpu.memory_space<semaphore_mem>>
      %11 = tpu.memref_squeeze %10 : memref<1x!tpu.dma_semaphore, #tpu.memory_space<semaphore_mem>> -> memref<!tpu.dma_semaphore, #tpu.memory_space<semaphore_mem>>
      tpu.enqueue_dma source(%arg5 : memref<1x96x16x128xf32, #tpu.memory_space<any>>) target(%9 : memref<1x96x16x128xf32, #tpu.memory_space<any>>) target_semaphore(%11 : memref<!tpu.dma_semaphore, #tpu.memory_space<semaphore_mem>>)
      %c5_i32 = arith.constant 5 : i32
      %c0_i32_8 = arith.constant 0 : i32
      %c232_i32 = arith.constant 232 : i32
      %c0_i32_9 = arith.constant 0 : i32
      %c0_i32_10 = arith.constant 0 : i32
      %12 = tpu.memref_slice %arg7[%c0_i32_8, %c232_i32, %c0_i32_9, %c0_i32_10] : memref<1x394x16x128xf32, #tpu.memory_space<any>> -> memref<1x160x16x128xf32, #tpu.memory_space<any>>
      %13 = tpu.memref_slice %arg8[%c5_i32] : memref<7x!tpu.dma_semaphore, #tpu.memory_space<semaphore_mem>> -> memref<1x!tpu.dma_semaphore, #tpu.memory_space<semaphore_mem>>
      %14 = tpu.memref_squeeze %13 : memref<1x!tpu.dma_semaphore, #tpu.memory_space<semaphore_mem>> -> memref<!tpu.dma_semaphore, #tpu.memory_space<semaphore_mem>>
      tpu.enqueue_dma source(%arg6 : memref<1x160x16x128xf32, #tpu.memory_space<any>>) target(%12 : memref<1x160x16x128xf32, #tpu.memory_space<any>>) target_semaphore(%14 : memref<!tpu.dma_semaphore, #tpu.memory_space<semaphore_mem>>)
      %c3_i32_11 = arith.constant 3 : i32
      %c0_i32_12 = arith.constant 0 : i32
      %c72_i32_13 = arith.constant 72 : i32
      %c0_i32_14 = arith.constant 0 : i32
      %c0_i32_15 = arith.constant 0 : i32
      %15 = tpu.memref_slice %arg7[%c0_i32_12, %c72_i32_13, %c0_i32_14, %c0_i32_15] : memref<1x394x16x128xf32, #tpu.memory_space<any>> -> memref<1x64x16x128xf32, #tpu.memory_space<any>>
      %16 = tpu.memref_slice %arg8[%c3_i32_11] : memref<7x!tpu.dma_semaphore, #tpu.memory_space<semaphore_mem>> -> memref<1x!tpu.dma_semaphore, #tpu.memory_space<semaphore_mem>>
      %17 = tpu.memref_squeeze %16 : memref<1x!tpu.dma_semaphore, #tpu.memory_space<semaphore_mem>> -> memref<!tpu.dma_semaphore, #tpu.memory_space<semaphore_mem>>
      tpu.wait_dma2 semaphore(%17 : memref<!tpu.dma_semaphore, #tpu.memory_space<semaphore_mem>>) src(%arg4 : memref<1x64x16x128xf32, #tpu.memory_space<any>>) dst(%15 : memref<1x64x16x128xf32, #tpu.memory_space<any>>)
      %c4_i32_16 = arith.constant 4 : i32
      %c0_i32_17 = arith.constant 0 : i32
      %c136_i32_18 = arith.constant 136 : i32
      %c0_i32_19 = arith.constant 0 : i32
      %c0_i32_20 = arith.constant 0 : i32
      %18 = tpu.memref_slice %arg7[%c0_i32_17, %c136_i32_18, %c0_i32_19, %c0_i32_20] : memref<1x394x16x128xf32, #tpu.memory_space<any>> -> memref<1x96x16x128xf32, #tpu.memory_space<any>>
      %19 = tpu.memref_slice %arg8[%c4_i32_16] : memref<7x!tpu.dma_semaphore, #tpu.memory_space<semaphore_mem>> -> memref<1x!tpu.dma_semaphore, #tpu.memory_space<semaphore_mem>>
      %20 = tpu.memref_squeeze %19 : memref<1x!tpu.dma_semaphore, #tpu.memory_space<semaphore_mem>> -> memref<!tpu.dma_semaphore, #tpu.memory_space<semaphore_mem>>
      tpu.wait_dma2 semaphore(%20 : memref<!tpu.dma_semaphore, #tpu.memory_space<semaphore_mem>>) src(%arg5 : memref<1x96x16x128xf32, #tpu.memory_space<any>>) dst(%18 : memref<1x96x16x128xf32, #tpu.memory_space<any>>)
      %c5_i32_21 = arith.constant 5 : i32
      %c0_i32_22 = arith.constant 0 : i32
      %c232_i32_23 = arith.constant 232 : i32
      %c0_i32_24 = arith.constant 0 : i32
      %c0_i32_25 = arith.constant 0 : i32
      %21 = tpu.memref_slice %arg7[%c0_i32_22, %c232_i32_23, %c0_i32_24, %c0_i32_25] : memref<1x394x16x128xf32, #tpu.memory_space<any>> -> memref<1x160x16x128xf32, #tpu.memory_space<any>>
      %22 = tpu.memref_slice %arg8[%c5_i32_21] : memref<7x!tpu.dma_semaphore, #tpu.memory_space<semaphore_mem>> -> memref<1x!tpu.dma_semaphore, #tpu.memory_space<semaphore_mem>>
      %23 = tpu.memref_squeeze %22 : memref<1x!tpu.dma_semaphore, #tpu.memory_space<semaphore_mem>> -> memref<!tpu.dma_semaphore, #tpu.memory_space<semaphore_mem>>
      tpu.wait_dma2 semaphore(%23 : memref<!tpu.dma_semaphore, #tpu.memory_space<semaphore_mem>>) src(%arg6 : memref<1x160x16x128xf32, #tpu.memory_space<any>>) dst(%21 : memref<1x160x16x128xf32, #tpu.memory_space<any>>)
    } else {
    }
    return
  }
}

</mosaic_0001>

<llo_original>
// kernel: tpu_custom_call.1
$region0: #{tpu_custom_call.1}
  #allocation0 [shape = 'u32[]', space=smem, size = 0x4, offset = 0x4, fixed_abs, tag = 'smem constant byte address 0x4 - core index']
  #allocation1 [shape = 'u32[144,128]{1,0:T(1,128)}', space=vmem, size = 0x12000, scoped, tag = 'internal scratch']
  #allocation2 [shape = 's32[7]{0}', space=sflag, size = 0x1c, scoped, tag = 'scratch operand']
  #allocation3 [shape = 's32[]', space=sflag, size = 0x4, offset = 0, fixed_abs, tag = 'sflag constant byte address 0x0 - dummy sync flag']
  #allocation4 [shape = 'u32[0]{0}', space=smem, size = 0, offset = 0, fixed_abs, tag = 'smem constant byte address 0x0 - null']
  #allocation5 [shape = 's32[]', space=sflag, size = 0x4, offset = 0, fixed_abs, tag = 'sflag constant byte address 0x0 - dummy sync flag']
  #allocation6 [shape = 'u32[0]{0}', space=smem, size = 0, offset = 0, fixed_abs, tag = 'smem constant byte address 0x0 - null']
  #allocation7 [shape = 's32[]', space=sflag, size = 0x4, offset = 0, fixed_abs, tag = 'sflag constant byte address 0x0 - dummy sync flag']
  #allocation8 [shape = 'u32[0]{0}', space=smem, size = 0, offset = 0, fixed_abs, tag = 'smem constant byte address 0x0 - null']
  #allocation9 [shape = 's32[]', space=sflag, size = 0x4, offset = 0, fixed_abs, tag = 'sflag constant byte address 0x0 - dummy sync flag']
  #allocation10 [shape = 'u32[0]{0}', space=smem, size = 0, offset = 0, fixed_abs, tag = 'smem constant byte address 0x0 - null']
  #allocation11 [shape = 's32[]', space=sflag, size = 0x4, offset = 0, fixed_abs, tag = 'sflag constant byte address 0x0 - dummy sync flag']
  #allocation12 [shape = 'u32[0]{0}', space=smem, size = 0, offset = 0, fixed_abs, tag = 'smem constant byte address 0x0 - null']
  #allocation13 [shape = 's32[]', space=sflag, size = 0x4, offset = 0, fixed_abs, tag = 'sflag constant byte address 0x0 - dummy sync flag']
  #allocation14 [shape = 'u32[0]{0}', space=smem, size = 0, offset = 0, fixed_abs, tag = 'smem constant byte address 0x0 - null']
  #allocation15 [shape = 's32[]', space=sflag, size = 0x4, offset = 0, fixed_abs, tag = 'sflag constant byte address 0x0 - dummy sync flag']
  #allocation16 [shape = 'u32[0]{0}', space=smem, size = 0, offset = 0, fixed_abs, tag = 'smem constant byte address 0x0 - null']
  %s0 = inlined_call_operand.hbm [shape: f32[1,16,16,128], index: 0, kind: input, shape index: {}]
  %s1 = inlined_call_operand.hbm [shape: f32[1,24,16,128], index: 1, kind: input, shape index: {}]
  %s2 = inlined_call_operand.hbm [shape: f32[1,32,16,128], index: 2, kind: input, shape index: {}]
  %s3 = inlined_call_operand.hbm [shape: f32[1,64,16,128], index: 3, kind: input, shape index: {}]
  %s4 = inlined_call_operand.hbm [shape: f32[1,96,16,128], index: 4, kind: input, shape index: {}]
  %s5 = inlined_call_operand.hbm [shape: f32[1,160,16,128], index: 5, kind: input, shape index: {}]
  %s6 = inlined_call_operand.hbm [shape: f32[1,394,16,128], index: 6, kind: output, shape index: {}]
  %s7 = sld [smem:[#allocation0]]
  $region17: #{tpu_custom_call.1} parent=0
    _
  %s9 = ssub.s32 1, %s7
  %s10 = scalar_select 0, %s9, %s7
  loop: start=0, step=1, limit=2
  $region2: #{tpu_custom_call.1} parent=0 // loop_pre_header
    _
  $region3: #{tpu_custom_call.1} parent=0 // loop_header
    %s12 = sphi 0, %s16
    %p13 = scmp.ge.s32.totalorder %s12, 2
  $region4: #{tpu_custom_call.1} parent=0 // loop_header_branch
    %15 = sbr.rel (%p13) target = $region8
  $region5: #{tpu_custom_call.1} parent=0 // loop_body
    %s17 = sadd.s32 %s12, 1
    %p18 = scmp.eq.s32.totalorder %s12, 0
    // Predicated region
    $region9: #{tpu_custom_call.1} parent=5 // pred_check
      %p19 = pneg %p18
    $region10: #{tpu_custom_call.1} parent=5 // pred_check_branch
      %21 = sbr.rel (%p19) target = $region12
    $region11: #{tpu_custom_call.1} parent=5 // pred_region
      %s23 = sshll.u32 1, 14
      %s24 = sxor.u32 4294967295, %s23
      %28 = dma.general %s0, 4096, %s6, [#allocation2], 131072, [#allocation4], 0, 0
      %s29 = scalar_lea.hbm %s6, 4096
      %s30 = scalar_lea.sflag [#allocation2], 1
      %s32 = sshll.u32 1, 14
      %s33 = sxor.u32 4294967295, %s32
      %37 = dma.general %s1, 6144, %s29, %s30, 131072, [#allocation6], 0, 0
      %s38 = scalar_lea.hbm %s6, 10240
      %s39 = scalar_lea.sflag [#allocation2], 2
      %s41 = sshll.u32 1, 14
      %s42 = sxor.u32 4294967295, %s41
      %46 = dma.general %s2, 8192, %s38, %s39, 131072, [#allocation8], 0, 0
      %s47 = scalar_lea.hbm %s6, 100352
      %s48 = scalar_lea.sflag [#allocation2], 6
      %s50 = sshll.u32 1, 14
      %s51 = sxor.u32 4294967295, %s50
      %55 = dma.general %s0, 512, %s47, %s48, 131072, [#allocation10], 0, 0
      %s56 = smul.u32 1, 16
      %s57 = smul.u32 %s56, 16
      %s58 = smul.u32 %s57, 1
      %s59 = sshll.u32 %s58, 4
      %60 = dma.done [#allocation2], %s59
      %s61 = smul.u32 1, 24
      %s62 = smul.u32 %s61, 16
      %s63 = smul.u32 %s62, 1
      %s64 = sshll.u32 %s63, 4
      %65 = dma.done %s30, %s64
      %s66 = smul.u32 1, 32
      %s67 = smul.u32 %s66, 16
      %s68 = smul.u32 %s67, 1
      %s69 = sshll.u32 %s68, 4
      %70 = dma.done %s39, %s69
      %s71 = smul.u32 1, 2
      %s72 = smul.u32 %s71, 16
      %s73 = smul.u32 %s72, 1
      %s74 = sshll.u32 %s73, 4
      %75 = dma.done %s48, %s74
    $region12: #{tpu_custom_call.1} parent=5 // pred_fallthru
      _
    %p76 = scmp.eq.s32.totalorder %s12, 1
    // Predicated region
    $region13: #{tpu_custom_call.1} parent=5 // pred_check
      %p77 = pneg %p76
    $region14: #{tpu_custom_call.1} parent=5 // pred_check_branch
      %79 = sbr.rel (%p77) target = $region16
    $region15: #{tpu_custom_call.1} parent=5 // pred_region
      %s80 = scalar_lea.hbm %s6, 18432
      %s81 = scalar_lea.sflag [#allocation2], 3
      %s83 = sshll.u32 1, 14
      %s84 = sxor.u32 4294967295, %s83
      %88 = dma.general %s3, 16384, %s80, %s81, 131072, [#allocation12], 0, 0
      %s89 = scalar_lea.hbm %s6, 34816
      %s90 = scalar_lea.sflag [#allocation2], 4
      %s92 = sshll.u32 1, 14
      %s93 = sxor.u32 4294967295, %s92
      %97 = dma.general %s4, 24576, %s89, %s90, 131072, [#allocation14], 0, 0
      %s98 = scalar_lea.hbm %s6, 59392
      %s99 = scalar_lea.sflag [#allocation2], 5
      %s101 = sshll.u32 1, 14
      %s102 = sxor.u32 4294967295, %s101
      %106 = dma.general %s5, 40960, %s98, %s99, 131072, [#allocation16], 0, 0
      %s107 = smul.u32 1, 64
      %s108 = smul.u32 %s107, 16
      %s109 = smul.u32 %s108, 1
      %s110 = sshll.u32 %s109, 4
      %111 = dma.done %s81, %s110
      %s112 = smul.u32 1, 96
      %s113 = smul.u32 %s112, 16
      %s114 = smul.u32 %s113, 1
      %s115 = sshll.u32 %s114, 4
      %116 = dma.done %s90, %s115
      %s117 = smul.u32 1, 160
      %s118 = smul.u32 %s117, 16
      %s119 = smul.u32 %s118, 1
      %s120 = sshll.u32 %s119, 4
      %121 = dma.done %s99, %s120
    $region16: #{tpu_custom_call.1} parent=5 // pred_fallthru
      _
  $region6: #{tpu_custom_call.1} parent=0 // loop_footer
    %s16 = sadd.s32 1, %s12
  $region7: #{tpu_custom_call.1} parent=0 // loop_footer_branch
    %11 = sbr.rel target = $region3
  $region8: #{tpu_custom_call.1} parent=0 // loop_exit
    _
  %122 = vsyncmov [#allocation2]
  %s123 = vpop.sfrf %122
  %p124 = scmp.eq.s32.totalorder %s123, 0
  %p125 = pneg %p124
  %127 = shalt.err (%p125)
  %s128 = scalar_lea.sflag [#allocation2], 1
  %129 = vsyncmov %s128
  %s130 = vpop.sfrf %129
  %p131 = scmp.eq.s32.totalorder %s130, 0
  %p132 = pneg %p131
  %134 = shalt.err (%p132)
  %s135 = scalar_lea.sflag [#allocation2], 2
  %136 = vsyncmov %s135
  %s137 = vpop.sfrf %136
  %p138 = scmp.eq.s32.totalorder %s137, 0
  %p139 = pneg %p138
  %141 = shalt.err (%p139)
  %s142 = scalar_lea.sflag [#allocation2], 3
  %143 = vsyncmov %s142
  %s144 = vpop.sfrf %143
  %p145 = scmp.eq.s32.totalorder %s144, 0
  %p146 = pneg %p145
  %148 = shalt.err (%p146)
  %s149 = scalar_lea.sflag [#allocation2], 4
  %150 = vsyncmov %s149
  %s151 = vpop.sfrf %150
  %p152 = scmp.eq.s32.totalorder %s151, 0
  %p153 = pneg %p152
  %155 = shalt.err (%p153)
  %s156 = scalar_lea.sflag [#allocation2], 5
  %157 = vsyncmov %s156
  %s158 = vpop.sfrf %157
  %p159 = scmp.eq.s32.totalorder %s158, 0
  %p160 = pneg %p159
  %162 = shalt.err (%p160)
  %s163 = scalar_lea.sflag [#allocation2], 6
  %164 = vsyncmov %s163
  %s165 = vpop.sfrf %164
  %p166 = scmp.eq.s32.totalorder %s165, 0
  %p167 = pneg %p166
  %169 = shalt.err (%p167)

</llo_original>
